<compile_context>
chip_gen: v7x
topology: tpu7x:2x2x1
jax: 0.10.0
libtpu: 0.0.40
codegen_flags: <defaults>
</compile_context>

<pallas_src>
import functools
import math

import numpy as np
import jax
import jax.numpy as jnp
from jax.experimental import pallas as pl
from jax.experimental.pallas import tpu as pltpu

RADIUS = 3          # module hardcodes self.radius = 3
SIGMA = 5.0         # module hardcodes self.sigema = 5
KSIZE = 2 * RADIUS + 1

# Use the dense conv-matrix (lane-dense, pure-MXU) path while the (H*W, H*W)
# matrix stays small; larger images take the separable fallback.
_MATRIX_BYTES_LIMIT = 4 * 1024 * 1024          # (H*W)^2 * 4B  ->  H*W <= 1024


# ---------------------------------------------------------------------------
# Weights (exactly reproduce GaussianSmoothing.template()).
# ---------------------------------------------------------------------------
def gaussian_template():
    """Normalized 7x7 Gaussian template (float64), identical to the module."""
    side = KSIZE
    result = np.zeros((side, side), dtype=np.float64)
    for i in range(side):
        for j in range(side):
            x, y = i - RADIUS, j - RADIUS
            res1 = 1.0 / (2.0 * math.pi * SIGMA * SIGMA)
            res2 = math.exp(-(x * x + y * y) / (2.0 * SIGMA * SIGMA))
            result[i, j] = res1 * res2
    return result / result.sum()


def _gaussian_1d():
    """1-D factor of the (rank-1) template: template == outer(g, g)."""
    g = np.array([math.exp(-((i - RADIUS) ** 2) / (2.0 * SIGMA * SIGMA))
                  for i in range(KSIZE)], dtype=np.float64)
    return g / g.sum()


_W1D_F64 = _gaussian_1d()
_W1D = tuple(float(v) for v in _W1D_F64)      # baked-in scalar taps (VPU path)


@functools.lru_cache(maxsize=None)
def _conv_matrix(H, W):
    """(H*W, H*W) matrix M with x_flat @ M == zero-padded 7x7 depthwise conv.

    M[ki*W+kj, qi*W+qj] = template[ki-qi+R, kj-qj+R] when both offsets are within
    the 7x7 support; out-of-image taps simply have no row -> zero padding for free.
    """
    w2d = gaussian_template()
    HW = H * W
    M = np.zeros((HW, HW), dtype=np.float64)
    for qi in range(H):
        for qj in range(W):
            q = qi * W + qj
            for di in range(-RADIUS, RADIUS + 1):
                ki = qi + di
                if not (0 <= ki < H):
                    continue
                for dj in range(-RADIUS, RADIUS + 1):
                    kj = qj + dj
                    if not (0 <= kj < W):
                        continue
                    M[ki * W + kj, q] = w2d[di + RADIUS, dj + RADIUS]
    return M.astype(np.float32)


@functools.lru_cache(maxsize=None)
def _h_toeplitz(W):
    """Banded (W, W) matrix T with T[i, j] = w[i - j + R]; rows @ T == 1-D conv
    along W with zero padding (same boundary handling as F.conv2d padding=R)."""
    T = np.zeros((W, W), dtype=np.float64)
    for j in range(W):
        for k in range(KSIZE):
            i = j + k - RADIUS
            if 0 <= i < W:
                T[i, j] = _W1D_F64[k]
    return T.astype(np.float32)


# ---------------------------------------------------------------------------
# Hardware-aware sizing.
# ---------------------------------------------------------------------------
def _tpu_vmem_capacity_bytes():
    """Physical VMEM per TensorCore; conservative 64 MiB (v7x) if unavailable."""
    try:
        info = pltpu.get_tpu_info()
        cap = getattr(info, "vmem_capacity_bytes", None)
        if cap:
            return int(cap)
    except Exception:
        pass
    return 64 * 1024 * 1024


def _vmem_limit_bytes(cap):
    # 48 MiB on v7x (64 MiB physical), 96 MiB on v5e/v6e (128 MiB physical).
    return min(cap * 3 // 4, 96 * 1024 * 1024)


def _block_target_bytes(cap):
    # ~4 MiB blocks on v7x, ~8 MiB on v5e/v6e; in-flight footprint is roughly
    # 2x in + 2x out + weights + temporaries ~= 6-7x block, well under the limit.
    return max(2 * 1024 * 1024, cap // 16)


def _pick_rows_per_block(P, HW, target_bytes, min_blocks=4):
    """Rows (planes) per block for the (P, H*W) matmul path.

    The sublane-axis block dim must be a multiple of 8 or span the full axis,
    it must divide P (no partial edge blocks), fit the byte target, and when the
    problem is big enough we keep >= min_blocks grid steps so v7x's two
    TensorCores each get several pipelined steps.
    """
    row_bytes = HW * 4
    cands = {P} | {cb for cb in range(8, P + 1, 8) if P % cb == 0}
    fitting = [cb for cb in cands if cb * row_bytes <= target_bytes]
    if not fitting:
        fitting = [min(cands)]
    parallel = [cb for cb in fitting if P // cb >= min_blocks]
    return max(parallel) if parallel else max(fitting)


def _pick_block_planes(P, H, W, target_bytes, min_blocks=4):
    """Planes per block for the separable fallback (plane axis is dim -3)."""
    plane_bytes = H * W * 4
    divisors = [cb for cb in range(1, P + 1) if P % cb == 0]
    fitting = [cb for cb in divisors if cb * plane_bytes <= target_bytes] or [1]
    parallel = [cb for cb in fitting if P // cb >= min_blocks]
    return max(parallel) if parallel else max(fitting)


def _split_bf16(m_f32):
    """Split an f32 array into (hi, lo) bf16 parts with hi + lo ~= m (bf16x3 trick)."""
    hi = m_f32.astype(jnp.bfloat16)
    lo = (m_f32 - hi.astype(jnp.float32)).astype(jnp.bfloat16)
    return hi, lo


# ---------------------------------------------------------------------------
# Kernels.
# ---------------------------------------------------------------------------
def _conv_matmul_kernel(x_ref, mhi_ref, mlo_ref, o_ref):
    """Whole zero-padded 7x7 depthwise conv as one lane-dense MXU matmul.

    x_ref/o_ref: (CB, H*W) block of flattened planes; m*_ref: (H*W, H*W) conv
    matrix split into bf16 hi/lo.  3 MXU passes (bf16x3 ~ Precision.HIGH) give
    well under 1e-4 error while halving the pass count vs HIGHEST.
    """
    x = x_ref[...].astype(jnp.float32)
    x_hi = x.astype(jnp.bfloat16)
    x_lo = (x - x_hi.astype(jnp.float32)).astype(jnp.bfloat16)
    acc = jnp.dot(x_hi, mhi_ref[...], preferred_element_type=jnp.float32)
    acc += jnp.dot(x_hi, mlo_ref[...], preferred_element_type=jnp.float32)
    acc += jnp.dot(x_lo, mhi_ref[...], preferred_element_type=jnp.float32)
    o_ref[...] = acc.astype(o_ref.dtype)


def _separable_kernel(x_ref, thi_ref, tlo_ref, o_ref, pad_ref):
    """Fallback for large planes: 7-tap vertical VPU pass (zero-haloed VMEM
    scratch) + horizontal 7-tap pass as a banded-Toeplitz matmul on the MXU."""
    CB, H, W = o_ref.shape
    xf = x_ref[...].astype(jnp.float32)

    # Zero-haloed copy along H (== conv2d zero padding).  Halos are re-zeroed
    # every step so correctness is independent of how the parallel axis is
    # sharded across cores.
    # NOTE: this costs one extra full-block VMEM store per step; the planes that
    # reach this fallback are large enough that the kernel is HBM-DMA bound, so
    # the vector-store slot is not the binding resource here.
    # TODO(synk): replace with masked pltpu.roll sublane shifts (XLU) if a bundle
    # dump ever shows the store slot saturating; add H-tiling with a +/-RADIUS
    # halo so a single huge plane never has to be fully VMEM-resident (v7x).
    pad_ref[:, :RADIUS, :] = jnp.zeros((CB, RADIUS, W), jnp.float32)
    pad_ref[:, RADIUS + H:, :] = jnp.zeros((CB, RADIUS, W), jnp.float32)
    pad_ref[:, RADIUS:RADIUS + H, :] = xf

    # Vertical 7-tap pass: sublane-offset loads + VPU mul/adds.
    acc = _W1D[0] * pad_ref[:, 0:H, :]
    for k in range(1, KSIZE):
        acc = acc + _W1D[k] * pad_ref[:, k:k + H, :]

    # Horizontal 7-tap pass on the MXU as a banded (W, W) matmul, bf16x3.
    # TODO(synk): for very large W (>~512) tile the band instead of a dense WxW.
    rows = acc.reshape(CB * H, W)
    r_hi = rows.astype(jnp.bfloat16)
    r_lo = (rows - r_hi.astype(jnp.float32)).astype(jnp.bfloat16)
    out = jnp.dot(r_hi, thi_ref[...], preferred_element_type=jnp.float32)
    out += jnp.dot(r_hi, tlo_ref[...], preferred_element_type=jnp.float32)
    out += jnp.dot(r_lo, thi_ref[...], preferred_element_type=jnp.float32)
    o_ref[...] = out.reshape(CB, H, W).astype(o_ref.dtype)


# ---------------------------------------------------------------------------
# Wrappers.
# ---------------------------------------------------------------------------
def _smooth_small(x):
    """Lane-dense conv-as-matmul path (H*W small enough for the dense matrix)."""
    N, C, H, W = x.shape
    P, HW = N * C, H * W
    xr = x.reshape(P, HW)                         # metadata-only reshape
    cap = _tpu_vmem_capacity_bytes()
    CB = _pick_rows_per_block(P, HW, _block_target_bytes(cap))
    m_hi, m_lo = _split_bf16(jnp.asarray(_conv_matrix(H, W)))

    out = pl.pallas_call(
        _conv_matmul_kernel,
        out_shape=jax.ShapeDtypeStruct((P, HW), x.dtype),
        grid=(P // CB,),
        in_specs=[
            pl.BlockSpec((CB, HW), lambda p: (p, 0)),
            pl.BlockSpec((HW, HW), lambda p: (0, 0)),
            pl.BlockSpec((HW, HW), lambda p: (0, 0)),
        ],
        out_specs=pl.BlockSpec((CB, HW), lambda p: (p, 0)),
        compiler_params=pltpu.CompilerParams(
            dimension_semantics=("parallel",),
            vmem_limit_bytes=_vmem_limit_bytes(cap)),
    )(xr, m_hi, m_lo)
    return out.reshape(N, C, H, W)


def _smooth_separable(x):
    """Separable fallback for images too large for the dense conv matrix."""
    N, C, H, W = x.shape
    P = N * C
    xr = x.reshape(P, H, W)                       # metadata-only reshape
    cap = _tpu_vmem_capacity_bytes()
    CB = _pick_block_planes(P, H, W, _block_target_bytes(cap))
    t_hi, t_lo = _split_bf16(jnp.asarray(_h_toeplitz(W)))

    out = pl.pallas_call(
        _separable_kernel,
        out_shape=jax.ShapeDtypeStruct((P, H, W), x.dtype),
        grid=(P // CB,),
        in_specs=[
            pl.BlockSpec((CB, H, W), lambda p: (p, 0, 0)),
            pl.BlockSpec((W, W), lambda p: (0, 0)),
            pl.BlockSpec((W, W), lambda p: (0, 0)),
        ],
        out_specs=pl.BlockSpec((CB, H, W), lambda p: (p, 0, 0)),
        scratch_shapes=[pltpu.VMEM((CB, H + 2 * RADIUS, W), jnp.float32)],
        compiler_params=pltpu.CompilerParams(
            dimension_semantics=("parallel",),
            vmem_limit_bytes=_vmem_limit_bytes(cap)),
    )(xr, t_hi, t_lo)
    return out.reshape(N, C, H, W)


def gaussian_smoothing(x):
    """x: (N, C, H, W) float32 -> (N, C, H, W): depthwise 7x7 Gaussian, zero pad.
    Matches GaussianSmoothing.forward (F.conv2d, groups=C, padding=3)."""
    _, _, H, W = x.shape
    if (H * W) * (H * W) * 4 <= _MATRIX_BYTES_LIMIT:
        return _smooth_small(x)
    return _smooth_separable(x)


# ---------------------------------------------------------------------------
# Reference & test.
# ---------------------------------------------------------------------------
def _reference_np(x):
    """Exact float64 depthwise 7x7 conv with zero padding (matches F.conv2d groups=C)."""
    x64 = np.asarray(x, dtype=np.float64)
    N, C, H, W = x64.shape
    w = gaussian_template()
    xp = np.pad(x64, ((0, 0), (0, 0), (RADIUS, RADIUS), (RADIUS, RADIUS)))
    out = np.zeros_like(x64)
    for ki in range(KSIZE):
        for kj in range(KSIZE):
            out += w[ki, kj] * xp[:, :, ki:ki + H, kj:kj + W]
    return out.astype(np.float32)


if __name__ == "__main__":
    key = jax.random.PRNGKey(0)
    x = jax.random.normal(key, (2, 4, 16, 16), dtype=jnp.float32)

    out = jax.block_until_ready(gaussian_smoothing(x))
    ref = _reference_np(np.asarray(x))

    assert out.shape == (2, 4, 16, 16) and out.dtype == jnp.float32
    np.testing.assert_allclose(np.asarray(out), ref, rtol=1e-4, atol=1e-4)

    print("KERNEL_OK")
</pallas_src>

<mosaic_0001>
module attributes {stable_mosaic.version = 11 : i64} {
  func.func @_conv_matmul_kernel(%arg0: i32, %arg1: memref<8x256xf32, #tpu.memory_space<vmem>>, %arg2: memref<256x256xbf16, #tpu.memory_space<vmem>>, %arg3: memref<256x256xbf16, #tpu.memory_space<vmem>>, %arg4: memref<8x256xf32, #tpu.memory_space<vmem>>) attributes {dimension_semantics = [#tpu.dimension_semantics<parallel>], iteration_bounds = array<i64: 1>, scalar_prefetch = 0 : i64, scratch_operands = 0 : i64, tpu.core_type = #tpu.core_type<tc>, window_params = [{transform_indices = @transform_0, window_bounds = array<i64: 8, 256>}, {pipeline_mode = #tpu.pipeline_mode<synchronous>, transform_indices = @transform_1, window_bounds = array<i64: 256, 256>}, {pipeline_mode = #tpu.pipeline_mode<synchronous>, transform_indices = @transform_2, window_bounds = array<i64: 256, 256>}, {transform_indices = @transform_3, window_bounds = array<i64: 8, 256>}]} {
    %c0 = arith.constant 0 : index
    %c0_0 = arith.constant 0 : index
    %0 = vector.load %arg1[%c0, %c0_0] : memref<8x256xf32, #tpu.memory_space<vmem>>, vector<8x256xf32>
    %1 = arith.truncf %0 : vector<8x256xf32> to vector<8x256xbf16>
    %2 = arith.extf %1 : vector<8x256xbf16> to vector<8x256xf32>
    %3 = arith.subf %0, %2 : vector<8x256xf32>
    %4 = arith.truncf %3 : vector<8x256xf32> to vector<8x256xbf16>
    %c0_1 = arith.constant 0 : index
    %c0_2 = arith.constant 0 : index
    %5 = vector.load %arg2[%c0_1, %c0_2] : memref<256x256xbf16, #tpu.memory_space<vmem>>, vector<256x256xbf16>
    %cst = arith.constant dense<0.000000e+00> : vector<8x256xf32>
    %6 = tpu.matmul %1, %5, %cst {dimension_numbers = #tpu.dot_dimension_numbers<[1], [0], [0], [1], [0, 0, 1, 1], [], []>} : vector<8x256xbf16>, vector<256x256xbf16>, vector<8x256xf32> -> vector<8x256xf32>
    %c0_3 = arith.constant 0 : index
    %c0_4 = arith.constant 0 : index
    %7 = vector.load %arg3[%c0_3, %c0_4] : memref<256x256xbf16, #tpu.memory_space<vmem>>, vector<256x256xbf16>
    %cst_5 = arith.constant dense<0.000000e+00> : vector<8x256xf32>
    %8 = tpu.matmul %1, %7, %cst_5 {dimension_numbers = #tpu.dot_dimension_numbers<[1], [0], [0], [1], [0, 0, 1, 1], [], []>} : vector<8x256xbf16>, vector<256x256xbf16>, vector<8x256xf32> -> vector<8x256xf32>
    %9 = arith.addf %6, %8 : vector<8x256xf32>
    %c0_6 = arith.constant 0 : index
    %c0_7 = arith.constant 0 : index
    %10 = vector.load %arg2[%c0_6, %c0_7] : memref<256x256xbf16, #tpu.memory_space<vmem>>, vector<256x256xbf16>
    %cst_8 = arith.constant dense<0.000000e+00> : vector<8x256xf32>
    %11 = tpu.matmul %4, %10, %cst_8 {dimension_numbers = #tpu.dot_dimension_numbers<[1], [0], [0], [1], [0, 0, 1, 1], [], []>} : vector<8x256xbf16>, vector<256x256xbf16>, vector<8x256xf32> -> vector<8x256xf32>
    %12 = arith.addf %9, %11 : vector<8x256xf32>
    %c0_9 = arith.constant 0 : index
    %c0_10 = arith.constant 0 : index
    %13 = vector.load %arg4[%c0_9, %c0_10] : memref<8x256xf32, #tpu.memory_space<vmem>>, vector<8x256xf32>
    tpu.vector_store %arg4[%c0_9, %c0_10], %12 {strides = array<i32>} : memref<8x256xf32, #tpu.memory_space<vmem>>, vector<8x256xf32>,
    return
  }
  func.func @transform_0(%arg0: i32) -> (i32, i32) {
    %c0_i32 = arith.constant 0 : i32
    %c0_i32_0 = arith.constant 0 : i32
    return %arg0, %c0_i32 : i32, i32
  }
  func.func @transform_1(%arg0: i32) -> (i32, i32) {
    %c0_i32 = arith.constant 0 : i32
    %c0_i32_0 = arith.constant 0 : i32
    %c0_i32_1 = arith.constant 0 : i32
    return %c0_i32, %c0_i32_0 : i32, i32
  }
  func.func @transform_2(%arg0: i32) -> (i32, i32) {
    %c0_i32 = arith.constant 0 : i32
    %c0_i32_0 = arith.constant 0 : i32
    %c0_i32_1 = arith.constant 0 : i32
    return %c0_i32, %c0_i32_0 : i32, i32
  }
  func.func @transform_3(%arg0: i32) -> (i32, i32) {
    %c0_i32 = arith.constant 0 : i32
    %c0_i32_0 = arith.constant 0 : i32
    return %arg0, %c0_i32 : i32, i32
  }
}

</mosaic_0001>

<llo_original>
// kernel: tpu_custom_call.1
$region0: #{tpu_custom_call.1}
  #allocation0 [shape = 'u32[]', space=smem, size = 0x4, offset = 0x4, fixed_abs, tag = 'smem constant byte address 0x4 - core index']
  #allocation1 [shape = 'u32[144,128]{1,0:T(1,128)}', space=vmem, size = 0x12000, scoped, tag = 'internal scratch']
  %s0 = inlined_call_operand.hbm [shape: f32[8,256], index: 0, kind: input, shape index: {}]
  %s1 = inlined_call_operand.hbm [shape: bf16[256,256], index: 1, kind: input, shape index: {}]
  %s2 = inlined_call_operand.hbm [shape: bf16[256,256], index: 2, kind: input, shape index: {}]
  %s3 = inlined_call_operand.hbm [shape: f32[8,256], index: 3, kind: output, shape index: {}]
  %s4 = sld [smem:[#allocation0]]
  $region34: #{tpu_custom_call.1} parent=0
    _
  %s6 = ssub.s32 1, %s4
  %s7 = scalar_select 0, %s6, %s4
  $region1: #{tpu_custom_call.1} parent=0
    #allocation2 [shape = 'u8[8192]{0}', space=vmem, size = 0x2000, scoped, tag = 'input window, operand 0, single buffered']
    #allocation3 [shape = 's32[1]{0}', space=sflag, size = 0x4, scoped, tag = 'scoped memory for tpu_custom_call.1']
    #allocation4 [shape = 's32[1]{0}', space=sflag, size = 0x4, scoped, tag = 'scoped memory for tpu_custom_call.1']
    #allocation5 [shape = 'u8[131072]{0}', space=vmem, size = 0x20000, scoped, tag = 'input window, operand 1, single buffered']
    #allocation6 [shape = 's32[1]{0}', space=sflag, size = 0x4, scoped, tag = 'scoped memory for tpu_custom_call.1']
    #allocation7 [shape = 'u8[131072]{0}', space=vmem, size = 0x20000, scoped, tag = 'input window, operand 2, single buffered']
    #allocation8 [shape = 'u8[8192]{0}', space=vmem, size = 0x2000, scoped, tag = 'output window, operand 0, single buffered']
    %8 = vsyncpa [#allocation3], 0
    %9 = vsyncpa [#allocation6], 0
    %10 = vsyncpa [#allocation4], 0
    // Predicated region
    $region2: #{tpu_custom_call.1} parent=1 // pred_check
      _
    $region3: #{tpu_custom_call.1} parent=1 // pred_check_branch
      %12 = sbr.rel (0) target = $region5
    $region4: #{tpu_custom_call.1} parent=1 // pred_region
      %s14 = ssub.s32 256, 256
      %15 = vsyncadd [#allocation3], %s14
      %s17 = sshll.u32 [#allocation2], 4
      %s18 = int_to_ptr.vmem [resolvable:$true] %s17
      %20 = dma.hbm_to_vmem [thread:$0]  %s0, 256, %s18, [#allocation3]
    $region5: #{tpu_custom_call.1} parent=1 // pred_fallthru
      _
    // Predicated region
    $region6: #{tpu_custom_call.1} parent=1 // pred_check
      _
    $region7: #{tpu_custom_call.1} parent=1 // pred_check_branch
      %22 = sbr.rel (0) target = $region9
    $region8: #{tpu_custom_call.1} parent=1 // pred_region
      %s24 = ssub.s32 4096, 4096
      %25 = vsyncadd [#allocation6], %s24
      %s26 = sshll.u32 [#allocation5], 4
      %s27 = int_to_ptr.vmem [resolvable:$true] %s26
      %32 = dma.hbm_to_vmem [thread:$0]  %s1, 4096, %s27, [#allocation6], 128, 128, 8
    $region9: #{tpu_custom_call.1} parent=1 // pred_fallthru
      _
    // Predicated region
    $region10: #{tpu_custom_call.1} parent=1 // pred_check
      _
    $region11: #{tpu_custom_call.1} parent=1 // pred_check_branch
      %34 = sbr.rel (0) target = $region13
    $region12: #{tpu_custom_call.1} parent=1 // pred_region
      %s36 = ssub.s32 4096, 4096
      %37 = vsyncadd [#allocation6], %s36
      %s38 = sshll.u32 [#allocation7], 4
      %s39 = int_to_ptr.vmem [resolvable:$true] %s38
      %44 = dma.hbm_to_vmem [thread:$0]  %s2, 4096, %s39, [#allocation6], 128, 128, 8
    $region13: #{tpu_custom_call.1} parent=1 // pred_fallthru
      _
    // Predicated region
    $region14: #{tpu_custom_call.1} parent=1 // pred_check
      _
    $region15: #{tpu_custom_call.1} parent=1 // pred_check_branch
      %46 = sbr.rel (0) target = $region17
    $region16: #{tpu_custom_call.1} parent=1 // pred_region
      %47 = dma.done [#allocation3], 256
    $region17: #{tpu_custom_call.1} parent=1 // pred_fallthru
      _
    // Predicated region
    $region18: #{tpu_custom_call.1} parent=1 // pred_check
      _
    $region19: #{tpu_custom_call.1} parent=1 // pred_check_branch
      %49 = sbr.rel (0) target = $region21
    $region20: #{tpu_custom_call.1} parent=1 // pred_region
      %50 = dma.done [#allocation6], 4096
    $region21: #{tpu_custom_call.1} parent=1 // pred_fallthru
      _
    // Predicated region
    $region22: #{tpu_custom_call.1} parent=1 // pred_check
      _
    $region23: #{tpu_custom_call.1} parent=1 // pred_check_branch
      %52 = sbr.rel (0) target = $region25
    $region24: #{tpu_custom_call.1} parent=1 // pred_region
      %53 = dma.done [#allocation6], 4096
    $region25: #{tpu_custom_call.1} parent=1 // pred_fallthru
      _
    %v54 = vld [vmem:[#allocation2] sm:$0xff]
    %v55 = vld [vmem:[#allocation2 + $0x8] sm:$0xff]
    %v56 = vpack.c.bf16 %v54, %v54
    %v57 = vpack.c.bf16 %v55, %v55
    %v58 = vunpack.c.l.bf16 %v56
    %v59 = vunpack.c.l.bf16 %v57
    %v60 = vsub.f32 %v54, %v58
    %v61 = vsub.f32 %v55, %v59
    %v62 = vpack.c.bf16 %v60, %v60
    %v63 = vpack.c.bf16 %v61, %v61
    %v64 = vld [vmem:[#allocation5] sm:$0xff]
    %v65 = vld [vmem:[#allocation5 + $0x8] sm:$0xff]
    %v66 = vld [vmem:[#allocation5 + $0x10] sm:$0xff]
    %v67 = vld [vmem:[#allocation5 + $0x18] sm:$0xff]
    %v68 = vld [vmem:[#allocation5 + $0x20] sm:$0xff]
    %v69 = vld [vmem:[#allocation5 + $0x28] sm:$0xff]
    %v70 = vld [vmem:[#allocation5 + $0x30] sm:$0xff]
    %v71 = vld [vmem:[#allocation5 + $0x38] sm:$0xff]
    %v72 = vld [vmem:[#allocation5 + $0x40] sm:$0xff]
    %v73 = vld [vmem:[#allocation5 + $0x48] sm:$0xff]
    %v74 = vld [vmem:[#allocation5 + $0x50] sm:$0xff]
    %v75 = vld [vmem:[#allocation5 + $0x58] sm:$0xff]
    %v76 = vld [vmem:[#allocation5 + $0x60] sm:$0xff]
    %v77 = vld [vmem:[#allocation5 + $0x68] sm:$0xff]
    %v78 = vld [vmem:[#allocation5 + $0x70] sm:$0xff]
    %v79 = vld [vmem:[#allocation5 + $0x78] sm:$0xff]
    %v80 = vld [vmem:[#allocation5 + $0x80] sm:$0xff]
    %v81 = vld [vmem:[#allocation5 + $0x88] sm:$0xff]
    %v82 = vld [vmem:[#allocation5 + $0x90] sm:$0xff]
    %v83 = vld [vmem:[#allocation5 + $0x98] sm:$0xff]
    %v84 = vld [vmem:[#allocation5 + $0xa0] sm:$0xff]
    %v85 = vld [vmem:[#allocation5 + $0xa8] sm:$0xff]
    %v86 = vld [vmem:[#allocation5 + $0xb0] sm:$0xff]
    %v87 = vld [vmem:[#allocation5 + $0xb8] sm:$0xff]
    %v88 = vld [vmem:[#allocation5 + $0xc0] sm:$0xff]
    %v89 = vld [vmem:[#allocation5 + $0xc8] sm:$0xff]
    %v90 = vld [vmem:[#allocation5 + $0xd0] sm:$0xff]
    %v91 = vld [vmem:[#allocation5 + $0xd8] sm:$0xff]
    %v92 = vld [vmem:[#allocation5 + $0xe0] sm:$0xff]
    %v93 = vld [vmem:[#allocation5 + $0xe8] sm:$0xff]
    %v94 = vld [vmem:[#allocation5 + $0xf0] sm:$0xff]
    %v95 = vld [vmem:[#allocation5 + $0xf8] sm:$0xff]
    %v96 = vld [vmem:[#allocation7] sm:$0xff]
    %v97 = vld [vmem:[#allocation7 + $0x8] sm:$0xff]
    %v98 = vld [vmem:[#allocation7 + $0x10] sm:$0xff]
    %v99 = vld [vmem:[#allocation7 + $0x18] sm:$0xff]
    %v100 = vld [vmem:[#allocation7 + $0x20] sm:$0xff]
    %v101 = vld [vmem:[#allocation7 + $0x28] sm:$0xff]
    %v102 = vld [vmem:[#allocation7 + $0x30] sm:$0xff]
    %v103 = vld [vmem:[#allocation7 + $0x38] sm:$0xff]
    %v104 = vld [vmem:[#allocation7 + $0x40] sm:$0xff]
    %v105 = vld [vmem:[#allocation7 + $0x48] sm:$0xff]
    %v106 = vld [vmem:[#allocation7 + $0x50] sm:$0xff]
    %v107 = vld [vmem:[#allocation7 + $0x58] sm:$0xff]
    %v108 = vld [vmem:[#allocation7 + $0x60] sm:$0xff]
    %v109 = vld [vmem:[#allocation7 + $0x68] sm:$0xff]
    %v110 = vld [vmem:[#allocation7 + $0x70] sm:$0xff]
    %v111 = vld [vmem:[#allocation7 + $0x78] sm:$0xff]
    %v112 = vld [vmem:[#allocation7 + $0x80] sm:$0xff]
    %v113 = vld [vmem:[#allocation7 + $0x88] sm:$0xff]
    %v114 = vld [vmem:[#allocation7 + $0x90] sm:$0xff]
    %v115 = vld [vmem:[#allocation7 + $0x98] sm:$0xff]
    %v116 = vld [vmem:[#allocation7 + $0xa0] sm:$0xff]
    %v117 = vld [vmem:[#allocation7 + $0xa8] sm:$0xff]
    %v118 = vld [vmem:[#allocation7 + $0xb0] sm:$0xff]
    %v119 = vld [vmem:[#allocation7 + $0xb8] sm:$0xff]
    %v120 = vld [vmem:[#allocation7 + $0xc0] sm:$0xff]
    %v121 = vld [vmem:[#allocation7 + $0xc8] sm:$0xff]
    %v122 = vld [vmem:[#allocation7 + $0xd0] sm:$0xff]
    %v123 = vld [vmem:[#allocation7 + $0xd8] sm:$0xff]
    %v124 = vld [vmem:[#allocation7 + $0xe0] sm:$0xff]
    %v125 = vld [vmem:[#allocation7 + $0xe8] sm:$0xff]
    %v126 = vld [vmem:[#allocation7 + $0xf0] sm:$0xff]
    %v127 = vld [vmem:[#allocation7 + $0xf8] sm:$0xff]
    %v160 = vunpack.c.l.b16 %v96
    %v161 = vunpack.c.h.b16 %v96
    %v162 = vunpack.c.l.b16 %v97
    %v163 = vunpack.c.h.b16 %v97
    %v164 = vunpack.c.l.b16 %v98
    %v165 = vunpack.c.h.b16 %v98
    %v166 = vunpack.c.l.b16 %v99
    %v167 = vunpack.c.h.b16 %v99
    %v168 = vunpack.c.l.b16 %v100
    %v169 = vunpack.c.h.b16 %v100
    %v170 = vunpack.c.l.b16 %v101
    %v171 = vunpack.c.h.b16 %v101
    %v172 = vunpack.c.l.b16 %v102
    %v173 = vunpack.c.h.b16 %v102
    %v174 = vunpack.c.l.b16 %v103
    %v175 = vunpack.c.h.b16 %v103
    %v176 = vunpack.c.l.b16 %v104
    %v177 = vunpack.c.h.b16 %v104
    %v178 = vunpack.c.l.b16 %v105
    %v179 = vunpack.c.h.b16 %v105
    %v180 = vunpack.c.l.b16 %v106
    %v181 = vunpack.c.h.b16 %v106
    %v182 = vunpack.c.l.b16 %v107
    %v183 = vunpack.c.h.b16 %v107
    %v184 = vunpack.c.l.b16 %v108
    %v185 = vunpack.c.h.b16 %v108
    %v186 = vunpack.c.l.b16 %v109
    %v187 = vunpack.c.h.b16 %v109
    %v188 = vunpack.c.l.b16 %v110
    %v189 = vunpack.c.h.b16 %v110
    %v190 = vunpack.c.l.b16 %v111
    %v191 = vunpack.c.h.b16 %v111
    %v192 = vunpack.c.l.b16 %v112
    %v193 = vunpack.c.h.b16 %v112
    %v194 = vunpack.c.l.b16 %v113
    %v195 = vunpack.c.h.b16 %v113
    %v196 = vunpack.c.l.b16 %v114
    %v197 = vunpack.c.h.b16 %v114
    %v198 = vunpack.c.l.b16 %v115
    %v199 = vunpack.c.h.b16 %v115
    %v200 = vunpack.c.l.b16 %v116
    %v201 = vunpack.c.h.b16 %v116
    %v202 = vunpack.c.l.b16 %v117
    %v203 = vunpack.c.h.b16 %v117
    %v204 = vunpack.c.l.b16 %v118
    %v205 = vunpack.c.h.b16 %v118
    %v206 = vunpack.c.l.b16 %v119
    %v207 = vunpack.c.h.b16 %v119
    %v208 = vunpack.c.l.b16 %v120
    %v209 = vunpack.c.h.b16 %v120
    %v210 = vunpack.c.l.b16 %v121
    %v211 = vunpack.c.h.b16 %v121
    %v212 = vunpack.c.l.b16 %v122
    %v213 = vunpack.c.h.b16 %v122
    %v214 = vunpack.c.l.b16 %v123
    %v215 = vunpack.c.h.b16 %v123
    %v216 = vunpack.c.l.b16 %v124
    %v217 = vunpack.c.h.b16 %v124
    %v218 = vunpack.c.l.b16 %v125
    %v219 = vunpack.c.h.b16 %v125
    %v220 = vunpack.c.l.b16 %v126
    %v221 = vunpack.c.h.b16 %v126
    %v222 = vunpack.c.l.b16 %v127
    %v223 = vunpack.c.h.b16 %v127
    %v224 = vpack.c.b16 %v162, %v160
    %v225 = vpack.c.b16 %v163, %v161
    %v226 = vpack.c.b16 %v166, %v164
    %v227 = vpack.c.b16 %v167, %v165
    %v228 = vpack.c.b16 %v170, %v168
    %v229 = vpack.c.b16 %v171, %v169
    %v230 = vpack.c.b16 %v174, %v172
    %v231 = vpack.c.b16 %v175, %v173
    %v232 = vpack.c.b16 %v178, %v176
    %v233 = vpack.c.b16 %v179, %v177
    %v234 = vpack.c.b16 %v182, %v180
    %v235 = vpack.c.b16 %v183, %v181
    %v236 = vpack.c.b16 %v186, %v184
    %v237 = vpack.c.b16 %v187, %v185
    %v238 = vpack.c.b16 %v190, %v188
    %v239 = vpack.c.b16 %v191, %v189
    %v240 = vpack.c.b16 %v194, %v192
    %v241 = vpack.c.b16 %v195, %v193
    %v242 = vpack.c.b16 %v198, %v196
    %v243 = vpack.c.b16 %v199, %v197
    %v244 = vpack.c.b16 %v202, %v200
    %v245 = vpack.c.b16 %v203, %v201
    %v246 = vpack.c.b16 %v206, %v204
    %v247 = vpack.c.b16 %v207, %v205
    %v248 = vpack.c.b16 %v210, %v208
    %v249 = vpack.c.b16 %v211, %v209
    %v250 = vpack.c.b16 %v214, %v212
    %v251 = vpack.c.b16 %v215, %v213
    %v252 = vpack.c.b16 %v218, %v216
    %v253 = vpack.c.b16 %v219, %v217
    %v254 = vpack.c.b16 %v222, %v220
    %v255 = vpack.c.b16 %v223, %v221
    %288 = vmatprep.subr.bf16.mxu0 %v225
    %289 = vmatpush1.bf16.msra.mxu0 %v224
    %290 = vmatprep.subr.bf16.mxu0 %v227
    %291 = vmatpush1.bf16.msra.mxu0 %v226
    %292 = vmatprep.subr.bf16.mxu0 %v229
    %293 = vmatpush1.bf16.msra.mxu0 %v228
    %294 = vmatprep.subr.bf16.mxu0 %v231
    %295 = vmatpush1.bf16.msra.mxu0 %v230
    %296 = vmatprep.subr.bf16.mxu0 %v233
    %297 = vmatpush1.bf16.msra.mxu0 %v232
    %298 = vmatprep.subr.bf16.mxu0 %v235
    %299 = vmatpush1.bf16.msra.mxu0 %v234
    %300 = vmatprep.subr.bf16.mxu0 %v237
    %301 = vmatpush1.bf16.msra.mxu0 %v236
    %302 = vmatprep.subr.bf16.mxu0 %v239
    %303 = vmatpush1.bf16.msra.mxu0 %v238
    %304 = vmatprep.subr.bf16.mxu0 %v241
    %305 = vmatpush1.bf16.msra.mxu0 %v240
    %306 = vmatprep.subr.bf16.mxu0 %v243
    %307 = vmatpush1.bf16.msra.mxu0 %v242
    %308 = vmatprep.subr.bf16.mxu0 %v245
    %309 = vmatpush1.bf16.msra.mxu0 %v244
    %310 = vmatprep.subr.bf16.mxu0 %v247
    %311 = vmatpush1.bf16.msra.mxu0 %v246
    %312 = vmatprep.subr.bf16.mxu0 %v249
    %313 = vmatpush1.bf16.msra.mxu0 %v248
    %314 = vmatprep.subr.bf16.mxu0 %v251
    %315 = vmatpush1.bf16.msra.mxu0 %v250
    %316 = vmatprep.subr.bf16.mxu0 %v253
    %317 = vmatpush1.bf16.msra.mxu0 %v252
    %318 = vmatprep.subr.bf16.mxu0 %v255
    %319 = vmatpush1.bf16.msra.mxu0 %v254
    %320 = vmatprep.mubr.bf16.mxu0 %v57
    %321 = vmatmul.mubr.bf16.gmra.mrb[0].mxu0 %v56
    %v322 = vpop.f32.mrb[0].mxu0
    %v323 = vadd.f32 0.0, %v322
    %v324 = vpop.f32.mrb[0].mxu0
    %v325 = vadd.f32 0.0, %v324
    %v326 = vpop.f32.mrb[0].mxu0
    %v327 = vpop.f32.mrb[0].mxu0
    %328 = vdwg.mxu0
    %v361 = vunpack.c.l.b16 %v64
    %v362 = vunpack.c.h.b16 %v64
    %v363 = vunpack.c.l.b16 %v65
    %v364 = vunpack.c.h.b16 %v65
    %v365 = vunpack.c.l.b16 %v66
    %v366 = vunpack.c.h.b16 %v66
    %v367 = vunpack.c.l.b16 %v67
    %v368 = vunpack.c.h.b16 %v67
    %v369 = vunpack.c.l.b16 %v68
    %v370 = vunpack.c.h.b16 %v68
    %v371 = vunpack.c.l.b16 %v69
    %v372 = vunpack.c.h.b16 %v69
    %v373 = vunpack.c.l.b16 %v70
    %v374 = vunpack.c.h.b16 %v70
    %v375 = vunpack.c.l.b16 %v71
    %v376 = vunpack.c.h.b16 %v71
    %v377 = vunpack.c.l.b16 %v72
    %v378 = vunpack.c.h.b16 %v72
    %v379 = vunpack.c.l.b16 %v73
    %v380 = vunpack.c.h.b16 %v73
    %v381 = vunpack.c.l.b16 %v74
    %v382 = vunpack.c.h.b16 %v74
    %v383 = vunpack.c.l.b16 %v75
    %v384 = vunpack.c.h.b16 %v75
    %v385 = vunpack.c.l.b16 %v76
    %v386 = vunpack.c.h.b16 %v76
    %v387 = vunpack.c.l.b16 %v77
    %v388 = vunpack.c.h.b16 %v77
    %v389 = vunpack.c.l.b16 %v78
    %v390 = vunpack.c.h.b16 %v78
    %v391 = vunpack.c.l.b16 %v79
    %v392 = vunpack.c.h.b16 %v79
    %v393 = vunpack.c.l.b16 %v80
    %v394 = vunpack.c.h.b16 %v80
    %v395 = vunpack.c.l.b16 %v81
    %v396 = vunpack.c.h.b16 %v81
    %v397 = vunpack.c.l.b16 %v82
    %v398 = vunpack.c.h.b16 %v82
    %v399 = vunpack.c.l.b16 %v83
    %v400 = vunpack.c.h.b16 %v83
    %v401 = vunpack.c.l.b16 %v84
    %v402 = vunpack.c.h.b16 %v84
    %v403 = vunpack.c.l.b16 %v85
    %v404 = vunpack.c.h.b16 %v85
    %v405 = vunpack.c.l.b16 %v86
    %v406 = vunpack.c.h.b16 %v86
    %v407 = vunpack.c.l.b16 %v87
    %v408 = vunpack.c.h.b16 %v87
    %v409 = vunpack.c.l.b16 %v88
    %v410 = vunpack.c.h.b16 %v88
    %v411 = vunpack.c.l.b16 %v89
    %v412 = vunpack.c.h.b16 %v89
    %v413 = vunpack.c.l.b16 %v90
    %v414 = vunpack.c.h.b16 %v90
    %v415 = vunpack.c.l.b16 %v91
    %v416 = vunpack.c.h.b16 %v91
    %v417 = vunpack.c.l.b16 %v92
    %v418 = vunpack.c.h.b16 %v92
    %v419 = vunpack.c.l.b16 %v93
    %v420 = vunpack.c.h.b16 %v93
    %v421 = vunpack.c.l.b16 %v94
    %v422 = vunpack.c.h.b16 %v94
    %v423 = vunpack.c.l.b16 %v95
    %v424 = vunpack.c.h.b16 %v95
    %v425 = vpack.c.b16 %v363, %v361
    %v426 = vpack.c.b16 %v364, %v362
    %v427 = vpack.c.b16 %v367, %v365
    %v428 = vpack.c.b16 %v368, %v366
    %v429 = vpack.c.b16 %v371, %v369
    %v430 = vpack.c.b16 %v372, %v370
    %v431 = vpack.c.b16 %v375, %v373
    %v432 = vpack.c.b16 %v376, %v374
    %v433 = vpack.c.b16 %v379, %v377
    %v434 = vpack.c.b16 %v380, %v378
    %v435 = vpack.c.b16 %v383, %v381
    %v436 = vpack.c.b16 %v384, %v382
    %v437 = vpack.c.b16 %v387, %v385
    %v438 = vpack.c.b16 %v388, %v386
    %v439 = vpack.c.b16 %v391, %v389
    %v440 = vpack.c.b16 %v392, %v390
    %v441 = vpack.c.b16 %v395, %v393
    %v442 = vpack.c.b16 %v396, %v394
    %v443 = vpack.c.b16 %v399, %v397
    %v444 = vpack.c.b16 %v400, %v398
    %v445 = vpack.c.b16 %v403, %v401
    %v446 = vpack.c.b16 %v404, %v402
    %v447 = vpack.c.b16 %v407, %v405
    %v448 = vpack.c.b16 %v408, %v406
    %v449 = vpack.c.b16 %v411, %v409
    %v450 = vpack.c.b16 %v412, %v410
    %v451 = vpack.c.b16 %v415, %v413
    %v452 = vpack.c.b16 %v416, %v414
    %v453 = vpack.c.b16 %v419, %v417
    %v454 = vpack.c.b16 %v420, %v418
    %v455 = vpack.c.b16 %v423, %v421
    %v456 = vpack.c.b16 %v424, %v422
    %489 = vmatprep.subr.bf16.mxu0 %v426
    %490 = vmatpush1.bf16.msra.mxu0 %v425
    %491 = vmatprep.subr.bf16.mxu0 %v428
    %492 = vmatpush1.bf16.msra.mxu0 %v427
    %493 = vmatprep.subr.bf16.mxu0 %v430
    %494 = vmatpush1.bf16.msra.mxu0 %v429
    %495 = vmatprep.subr.bf16.mxu0 %v432
    %496 = vmatpush1.bf16.msra.mxu0 %v431
    %497 = vmatprep.subr.bf16.mxu0 %v434
    %498 = vmatpush1.bf16.msra.mxu0 %v433
    %499 = vmatprep.subr.bf16.mxu0 %v436
    %500 = vmatpush1.bf16.msra.mxu0 %v435
    %501 = vmatprep.subr.bf16.mxu0 %v438
    %502 = vmatpush1.bf16.msra.mxu0 %v437
    %503 = vmatprep.subr.bf16.mxu0 %v440
    %504 = vmatpush1.bf16.msra.mxu0 %v439
    %505 = vmatprep.subr.bf16.mxu0 %v442
    %506 = vmatpush1.bf16.msra.mxu0 %v441
    %507 = vmatprep.subr.bf16.mxu0 %v444
    %508 = vmatpush1.bf16.msra.mxu0 %v443
    %509 = vmatprep.subr.bf16.mxu0 %v446
    %510 = vmatpush1.bf16.msra.mxu0 %v445
    %511 = vmatprep.subr.bf16.mxu0 %v448
    %512 = vmatpush1.bf16.msra.mxu0 %v447
    %513 = vmatprep.subr.bf16.mxu0 %v450
    %514 = vmatpush1.bf16.msra.mxu0 %v449
    %515 = vmatprep.subr.bf16.mxu0 %v452
    %516 = vmatpush1.bf16.msra.mxu0 %v451
    %517 = vmatprep.subr.bf16.mxu0 %v454
    %518 = vmatpush1.bf16.msra.mxu0 %v453
    %519 = vmatprep.subr.bf16.mxu0 %v456
    %520 = vmatpush1.bf16.msra.mxu0 %v455
    %521 = vmatprep.mubr.bf16.mxu0 %v57
    %522 = vmatmul.mubr.bf16.gmra.mrb[0].mxu0 %v56
    %v523 = vpop.f32.mrb[0].mxu0
    %v524 = vadd.f32 %v323, %v523
    %v525 = vpop.f32.mrb[0].mxu0
    %v526 = vadd.f32 %v325, %v525
    %v527 = vpop.f32.mrb[0].mxu0
    %v528 = vpop.f32.mrb[0].mxu0
    %529 = vdwg.mxu0
    %530 = vmatprep.subr.bf16.mxu0 %v426
    %531 = vmatpush1.bf16.msra.mxu0 %v425
    %532 = vmatprep.subr.bf16.mxu0 %v428
    %533 = vmatpush1.bf16.msra.mxu0 %v427
    %534 = vmatprep.subr.bf16.mxu0 %v430
    %535 = vmatpush1.bf16.msra.mxu0 %v429
    %536 = vmatprep.subr.bf16.mxu0 %v432
    %537 = vmatpush1.bf16.msra.mxu0 %v431
    %538 = vmatprep.subr.bf16.mxu0 %v434
    %539 = vmatpush1.bf16.msra.mxu0 %v433
    %540 = vmatprep.subr.bf16.mxu0 %v436
    %541 = vmatpush1.bf16.msra.mxu0 %v435
    %542 = vmatprep.subr.bf16.mxu0 %v438
    %543 = vmatpush1.bf16.msra.mxu0 %v437
    %544 = vmatprep.subr.bf16.mxu0 %v440
    %545 = vmatpush1.bf16.msra.mxu0 %v439
    %546 = vmatprep.subr.bf16.mxu0 %v442
    %547 = vmatpush1.bf16.msra.mxu0 %v441
    %548 = vmatprep.subr.bf16.mxu0 %v444
    %549 = vmatpush1.bf16.msra.mxu0 %v443
    %550 = vmatprep.subr.bf16.mxu0 %v446
    %551 = vmatpush1.bf16.msra.mxu0 %v445
    %552 = vmatprep.subr.bf16.mxu0 %v448
    %553 = vmatpush1.bf16.msra.mxu0 %v447
    %554 = vmatprep.subr.bf16.mxu0 %v450
    %555 = vmatpush1.bf16.msra.mxu0 %v449
    %556 = vmatprep.subr.bf16.mxu0 %v452
    %557 = vmatpush1.bf16.msra.mxu0 %v451
    %558 = vmatprep.subr.bf16.mxu0 %v454
    %559 = vmatpush1.bf16.msra.mxu0 %v453
    %560 = vmatprep.subr.bf16.mxu0 %v456
    %561 = vmatpush1.bf16.msra.mxu0 %v455
    %562 = vmatprep.mubr.bf16.mxu0 %v63
    %563 = vmatmul.mubr.bf16.gmra.mrb[0].mxu0 %v62
    %v564 = vpop.f32.mrb[0].mxu0
    %v565 = vadd.f32 0.0, %v564
    %v566 = vpop.f32.mrb[0].mxu0
    %v567 = vadd.f32 0.0, %v566
    %v568 = vpop.f32.mrb[0].mxu0
    %v569 = vpop.f32.mrb[0].mxu0
    %570 = vdwg.mxu0
    %v571 = vadd.f32 %v524, %v565
    %v572 = vadd.f32 %v526, %v567
    %573 = vst [vmem:[#allocation8] sm:$0xff] %v571
    %574 = vst [vmem:[#allocation8 + $0x8] sm:$0xff] %v572
    // Predicated region
    $region26: #{tpu_custom_call.1} parent=1 // pred_check
      _
    $region27: #{tpu_custom_call.1} parent=1 // pred_check_branch
      %576 = sbr.rel (0) target = $region29
    $region28: #{tpu_custom_call.1} parent=1 // pred_region
      %s578 = ssub.s32 256, 256
      %579 = vsyncadd [#allocation4], %s578
      %s581 = sshll.u32 [#allocation8], 4
      %s582 = int_to_ptr.vmem [resolvable:$true] %s581
      %584 = dma.vmem_to_hbm [thread:$0]  %s582, 256, %s3, [#allocation4]
    $region29: #{tpu_custom_call.1} parent=1 // pred_fallthru
      _
    // Predicated region
    $region30: #{tpu_custom_call.1} parent=1 // pred_check
      _
    $region31: #{tpu_custom_call.1} parent=1 // pred_check_branch
      %586 = sbr.rel (0) target = $region33
    $region32: #{tpu_custom_call.1} parent=1 // pred_region
      %587 = dma.done [#allocation4], 256
    $region33: #{tpu_custom_call.1} parent=1 // pred_fallthru
      _
    %588 = vsyncpa [#allocation3], 1
    %589 = vsyncpa [#allocation6], 1
    %590 = vsyncpa [#allocation4], 1

</llo_original>
